<compile_context>
chip_gen: v7x
topology: tpu7x:2x2x1
jax: 0.10.0
libtpu: 0.0.40
codegen_flags: <defaults>
</compile_context>

<pallas_src>
import jax
import jax.numpy as jnp
import numpy as np
from jax.experimental import pallas as pl
from jax.experimental.pallas import tpu as pltpu

BN_EPS = 1e-5


def _round_up(x: int, m: int) -> int:
    return (x + m - 1) // m * m


# -----------------------------------------------------------------------------
# Host-side parameter preparation (done once, reused across forward calls).
# -----------------------------------------------------------------------------
def pack_params(params, bn_eps: float = BN_EPS):
    """Fold BN into layer 0 and pack weights (bf16) / biases (f32) into slabs."""
    weights = [jnp.asarray(w, jnp.float32) for w in params["weights"]]
    biases = [jnp.asarray(b, jnp.float32).reshape(1, -1) for b in params["biases"]]

    # Fold BatchNorm1d (eval mode) into the first Linear layer.
    scale = (params["bn_gamma"] * jax.lax.rsqrt(params["bn_var"] + bn_eps)).reshape(1, -1)
    shift = params["bn_beta"].reshape(1, -1) - params["bn_mean"].reshape(1, -1) * scale
    w0 = weights[0] * scale.reshape(-1, 1)
    b0 = shift @ weights[0] + biases[0]
    weights = [w0] + weights[1:]
    biases = [b0] + biases[1:]

    dims = [weights[0].shape[0]] + [w.shape[1] for w in weights]
    lane_dims = [_round_up(d, 128) for d in dims[1:]]      # out dims -> 128-lane pad
    lane_w = max(lane_dims)
    n_layers = len(weights)

    # Row (input) padding: layer 0 only to the bf16 sublane tile (16); layers>0
    # must equal the previous layer's lane-padded out width.
    row_dims = [_round_up(dims[0], 16)] + lane_dims[:-1]

    blocks, layer_meta, row = [], [], 0
    for i, w in enumerate(weights):
        pin, pout = row_dims[i], lane_dims[i]
        wp = jnp.zeros((pin, lane_w), jnp.float32).at[: w.shape[0], : w.shape[1]].set(w)
        blocks.append(wp)
        layer_meta.append((row, pin, pout))                # (row_off, pin, pout)
        row += pin
    w_slab = jnp.concatenate(blocks, axis=0).astype(jnp.bfloat16)

    b_rows = _round_up(n_layers, 8)
    b_pack = jnp.zeros((b_rows, lane_w), jnp.float32)
    for i, b in enumerate(biases):
        b_pack = b_pack.at[i, : b.shape[1]].set(b[0])

    return {
        "w_slab": w_slab,                                   # bf16, tile-aligned rows
        "biases": b_pack,                                   # f32, one row per layer
        "layer_meta": tuple(layer_meta),
        "in_dim": int(dims[0]),
        "in_dim_padded": int(row_dims[0]),
        "num_actions": int(dims[-1]),
        "lane_w": int(lane_w),
    }


# -----------------------------------------------------------------------------
# Pallas kernel.
# -----------------------------------------------------------------------------
def _make_kernel(layer_meta, num_actions):
    """Kernel body for a fixed (static) layer layout inside the packed slabs."""
    n = len(layer_meta)

    def kernel(x_ref, w_ref, b_ref, out_ref):
        h = x_ref[...].astype(jnp.bfloat16)                 # (tb, Dp) bf16 MXU input
        b_all = b_ref[...]                                  # (Lp, lane_w) f32, tiny
        for i, (off, pin, pout) in enumerate(layer_meta):
            w = w_ref[off:off + pin, :pout]                 # static tile-aligned bf16 slice
            acc = jnp.dot(h, w, preferred_element_type=jnp.float32)
            acc = acc + b_all[i:i + 1, :pout]               # f32 bias add
            if i < n - 1:
                h = jnp.tanh(acc).astype(jnp.bfloat16)      # f32 tanh, bf16 for next dot
            else:
                h = acc                                     # final layer stays f32
        out_ref[...] = h[:, :num_actions].astype(out_ref.dtype)   # narrow (tb, A) store

    return kernel


# -----------------------------------------------------------------------------
# Wrapper.
# -----------------------------------------------------------------------------
def estimator_network_forward(s, packed, *, block_batch: int = 1024):
    """Forward pass of the EstimatorNetwork using the Pallas kernel.

    Args:
      s: (batch, *state_shape) state tensor.
      packed: output of pack_params().
    Returns:
      (batch, num_actions) f32 Q-values.
    """
    batch = s.shape[0]
    d = int(np.prod(s.shape[1:]))
    assert d == packed["in_dim"], "state_shape does not match packed params"
    dp = packed["in_dim_padded"]
    na = packed["num_actions"]
    layer_meta = packed["layer_meta"]
    w_slab, b_pack = packed["w_slab"], packed["biases"]

    x = s.reshape(batch, d)                                  # nn.Flatten()
    if x.dtype != jnp.float32 and x.dtype != jnp.bfloat16:
        x = x.astype(jnp.float32)
    if dp != d:                                              # only when D % 16 != 0
        x = jnp.pad(x, ((0, 0), (0, dp - d)))

    # Batch tile: multiple of 16 (bf16 sublane packing); force >= 2 grid steps
    # when the batch allows it so both v7x TensorCores get work ("parallel").
    tb = min(block_batch, _round_up(batch, 16))
    if batch > 16 and pl.cdiv(batch, tb) < 2:
        tb = _round_up(pl.cdiv(batch, 2), 16)
    grid = (pl.cdiv(batch, tb),)

    flops = 2 * batch * sum(pin * pout for _, pin, pout in layer_meta)
    transcendentals = batch * sum(pout for _, _, pout in layer_meta[:-1])
    bytes_accessed = int(x.size * x.dtype.itemsize + w_slab.size * 2
                         + b_pack.size * 4 + batch * na * 4)

    kernel = _make_kernel(layer_meta, na)

    out = pl.pallas_call(
        kernel,
        out_shape=jax.ShapeDtypeStruct((batch, na), jnp.float32),
        grid_spec=pltpu.PrefetchScalarGridSpec(
            num_scalar_prefetch=0,
            grid=grid,
            in_specs=[
                pl.BlockSpec((tb, dp), lambda i: (i, 0)),         # activations: pipelined
                pl.BlockSpec(w_slab.shape, lambda i: (0, 0)),     # weights: VMEM-resident
                pl.BlockSpec(b_pack.shape, lambda i: (0, 0)),     # biases:  VMEM-resident
            ],
            out_specs=pl.BlockSpec((tb, na), lambda i: (i, 0)),   # true-width output block
        ),
        compiler_params=pltpu.CompilerParams(
            dimension_semantics=("parallel",),
            vmem_limit_bytes=32 * 1024 * 1024,
        ),
        cost_estimate=pl.CostEstimate(
            flops=int(flops),
            transcendentals=int(transcendentals),
            bytes_accessed=bytes_accessed,
        ),
    )(x, w_slab, b_pack)

    return out


# -----------------------------------------------------------------------------
# Parameter init + plain-JAX references (for correctness checks).
# -----------------------------------------------------------------------------
def init_params(key, state_shape, mlp_layers, num_actions):
    """Deterministic parameter init mirroring the PyTorch module's shapes."""
    d = int(np.prod(state_shape))
    layer_dims = [d] + list(mlp_layers) + [num_actions]

    keys = jax.random.split(key, 2 * (len(layer_dims) - 1) + 4)
    ki = iter(range(len(keys)))

    bn_gamma = jax.random.uniform(keys[next(ki)], (1, d), jnp.float32, 0.5, 1.5)
    bn_beta = jax.random.uniform(keys[next(ki)], (1, d), jnp.float32, -0.5, 0.5)
    bn_mean = jax.random.uniform(keys[next(ki)], (1, d), jnp.float32, -0.1, 0.1)
    bn_var = jax.random.uniform(keys[next(ki)], (1, d), jnp.float32, 0.5, 1.5)

    weights, biases = [], []
    for i in range(len(layer_dims) - 1):
        fan_in, fan_out = layer_dims[i], layer_dims[i + 1]
        bound = 1.0 / np.sqrt(fan_in)
        w = jax.random.uniform(keys[next(ki)], (fan_in, fan_out),
                               jnp.float32, -bound, bound)
        b = jax.random.uniform(keys[next(ki)], (1, fan_out),
                               jnp.float32, -bound, bound)
        weights.append(w)
        biases.append(b)

    return {
        "bn_mean": bn_mean,
        "bn_var": bn_var,
        "bn_gamma": bn_gamma,
        "bn_beta": bn_beta,
        "weights": weights,
        "biases": biases,
    }


def reference_forward(s, params):
    """Plain-JAX f32 reference of the module's forward pass (eval-mode BN)."""
    batch = s.shape[0]
    x = s.reshape(batch, -1).astype(jnp.float32)
    h = (x - params["bn_mean"]) * jax.lax.rsqrt(params["bn_var"] + BN_EPS) \
        * params["bn_gamma"] + params["bn_beta"]
    n = len(params["weights"])
    for i, (w, b) in enumerate(zip(params["weights"], params["biases"])):
        h = h @ w + b
        if i < n - 1:
            h = jnp.tanh(h)
    return h


def reference_forward_packed(s, packed):
    """Plain-JAX forward using the packed bf16 params: mirrors kernel numerics."""
    batch = s.shape[0]
    d, dp = packed["in_dim"], packed["in_dim_padded"]
    x = s.reshape(batch, d).astype(jnp.float32)
    if dp != d:
        x = jnp.pad(x, ((0, 0), (0, dp - d)))
    h = x.astype(jnp.bfloat16)
    n = len(packed["layer_meta"])
    for i, (off, pin, pout) in enumerate(packed["layer_meta"]):
        w = packed["w_slab"][off:off + pin, :pout]
        b = packed["biases"][i:i + 1, :pout]
        acc = jnp.dot(h, w, preferred_element_type=jnp.float32) + b
        h = jnp.tanh(acc).astype(jnp.bfloat16) if i < n - 1 else acc
    return h[:, :packed["num_actions"]]


if __name__ == "__main__":
    # Small, module-consistent configuration.
    state_shape = [4, 4, 4]      # flattened -> D = 64
    mlp_layers = [32, 32]
    num_actions = 2

    key = jax.random.PRNGKey(0)
    k_params, k_input = jax.random.split(key)

    params = init_params(k_params, state_shape, mlp_layers, num_actions)
    packed = pack_params(params)             # BN folding + bf16 slab packing (host, once)

    # batch=8: single (partial) tile.  batch=40: two grid steps + partial tail block.
    for batch in (8, 40):
        ks = jax.random.fold_in(k_input, batch)
        s = jax.random.normal(ks, (batch, *state_shape), jnp.float32)

        q = jax.block_until_ready(estimator_network_forward(s, packed))
        assert q.shape == (batch, num_actions)

        # Tight check vs. a plain-JAX reference with identical (bf16) numerics.
        q_pk = reference_forward_packed(s, packed)
        np.testing.assert_allclose(np.asarray(q), np.asarray(q_pk),
                                   rtol=1e-2, atol=5e-3)

        # Semantic check vs. the full-f32 module reference (bf16 weight tolerance).
        q_ref = reference_forward(s, params)
        np.testing.assert_allclose(np.asarray(q), np.asarray(q_ref),
                                   rtol=5e-2, atol=5e-2)

    print("KERNEL_OK")
</pallas_src>

<mosaic_0001>
module attributes {stable_mosaic.version = 11 : i64} {
  func.func @kernel(%arg0: i32, %arg1: memref<16x64xf32, #tpu.memory_space<vmem>>, %arg2: memref<320x128xbf16, #tpu.memory_space<vmem>>, %arg3: memref<8x128xf32, #tpu.memory_space<vmem>>, %arg4: memref<16x2xf32, #tpu.memory_space<vmem>>) attributes {dimension_semantics = [#tpu.dimension_semantics<parallel>], iteration_bounds = array<i64: 1>, scalar_prefetch = 0 : i64, scratch_operands = 0 : i64, tpu.core_type = #tpu.core_type<tc>, window_params = [{transform_indices = @transform_0, window_bounds = array<i64: 16, 64>}, {pipeline_mode = #tpu.pipeline_mode<synchronous>, transform_indices = @transform_1, window_bounds = array<i64: 320, 128>}, {pipeline_mode = #tpu.pipeline_mode<synchronous>, transform_indices = @transform_2, window_bounds = array<i64: 8, 128>}, {transform_indices = @transform_3, window_bounds = array<i64: 16, 2>}]} {
    %c0 = arith.constant 0 : index
    %c0_0 = arith.constant 0 : index
    %0 = vector.load %arg1[%c0, %c0_0] : memref<16x64xf32, #tpu.memory_space<vmem>>, vector<16x64xf32>
    %1 = arith.truncf %0 : vector<16x64xf32> to vector<16x64xbf16>
    %c0_1 = arith.constant 0 : index
    %c0_2 = arith.constant 0 : index
    %2 = vector.load %arg3[%c0_1, %c0_2] : memref<8x128xf32, #tpu.memory_space<vmem>>, vector<8x128xf32>
    %c0_3 = arith.constant 0 : index
    %c0_4 = arith.constant 0 : index
    %3 = vector.load %arg2[%c0_3, %c0_4] : memref<320x128xbf16, #tpu.memory_space<vmem>>, vector<64x128xbf16>
    %cst = arith.constant dense<0.000000e+00> : vector<16x128xf32>
    %4 = tpu.matmul %1, %3, %cst {dimension_numbers = #tpu.dot_dimension_numbers<[1], [0], [0], [1], [0, 0, 1, 1], [], []>} : vector<16x64xbf16>, vector<64x128xbf16>, vector<16x128xf32> -> vector<16x128xf32>
    %5 = vector.extract_strided_slice %2 {offsets = [0, 0], sizes = [1, 128], strides = [1, 1]} : vector<8x128xf32> to vector<1x128xf32>
    %6 = vector.broadcast %5 : vector<1x128xf32> to vector<16x128xf32>
    %7 = arith.addf %4, %6 : vector<16x128xf32>
    %8 = math.tanh %7 : vector<16x128xf32>
    %9 = arith.truncf %8 : vector<16x128xf32> to vector<16x128xbf16>
    %c64 = arith.constant 64 : index
    %c0_5 = arith.constant 0 : index
    %10 = vector.load %arg2[%c64, %c0_5] : memref<320x128xbf16, #tpu.memory_space<vmem>>, vector<128x128xbf16>
    %cst_6 = arith.constant dense<0.000000e+00> : vector<16x128xf32>
    %11 = tpu.matmul %9, %10, %cst_6 {dimension_numbers = #tpu.dot_dimension_numbers<[1], [0], [0], [1], [0, 0, 1, 1], [], []>} : vector<16x128xbf16>, vector<128x128xbf16>, vector<16x128xf32> -> vector<16x128xf32>
    %12 = vector.extract_strided_slice %2 {offsets = [1, 0], sizes = [1, 128], strides = [1, 1]} : vector<8x128xf32> to vector<1x128xf32>
    %13 = vector.broadcast %12 : vector<1x128xf32> to vector<16x128xf32>
    %14 = arith.addf %11, %13 : vector<16x128xf32>
    %15 = math.tanh %14 : vector<16x128xf32>
    %16 = arith.truncf %15 : vector<16x128xf32> to vector<16x128xbf16>
    %c192 = arith.constant 192 : index
    %c0_7 = arith.constant 0 : index
    %17 = vector.load %arg2[%c192, %c0_7] : memref<320x128xbf16, #tpu.memory_space<vmem>>, vector<128x128xbf16>
    %cst_8 = arith.constant dense<0.000000e+00> : vector<16x128xf32>
    %18 = tpu.matmul %16, %17, %cst_8 {dimension_numbers = #tpu.dot_dimension_numbers<[1], [0], [0], [1], [0, 0, 1, 1], [], []>} : vector<16x128xbf16>, vector<128x128xbf16>, vector<16x128xf32> -> vector<16x128xf32>
    %19 = vector.extract_strided_slice %2 {offsets = [2, 0], sizes = [1, 128], strides = [1, 1]} : vector<8x128xf32> to vector<1x128xf32>
    %20 = vector.broadcast %19 : vector<1x128xf32> to vector<16x128xf32>
    %21 = arith.addf %18, %20 : vector<16x128xf32>
    %22 = vector.extract_strided_slice %21 {offsets = [0, 0], sizes = [16, 2], strides = [1, 1]} : vector<16x128xf32> to vector<16x2xf32>
    %c0_9 = arith.constant 0 : index
    %c0_10 = arith.constant 0 : index
    %23 = vector.load %arg4[%c0_9, %c0_10] : memref<16x2xf32, #tpu.memory_space<vmem>>, vector<16x2xf32>
    tpu.vector_store %arg4[%c0_9, %c0_10], %22 {strides = array<i32>} : memref<16x2xf32, #tpu.memory_space<vmem>>, vector<16x2xf32>,
    return
  }
  func.func @transform_0(%arg0: i32) -> (i32, i32) {
    %c0_i32 = arith.constant 0 : i32
    %c0_i32_0 = arith.constant 0 : i32
    return %arg0, %c0_i32 : i32, i32
  }
  func.func @transform_1(%arg0: i32) -> (i32, i32) {
    %c0_i32 = arith.constant 0 : i32
    %c0_i32_0 = arith.constant 0 : i32
    %c0_i32_1 = arith.constant 0 : i32
    return %c0_i32, %c0_i32_0 : i32, i32
  }
  func.func @transform_2(%arg0: i32) -> (i32, i32) {
    %c0_i32 = arith.constant 0 : i32
    %c0_i32_0 = arith.constant 0 : i32
    %c0_i32_1 = arith.constant 0 : i32
    return %c0_i32, %c0_i32_0 : i32, i32
  }
  func.func @transform_3(%arg0: i32) -> (i32, i32) {
    %c0_i32 = arith.constant 0 : i32
    %c0_i32_0 = arith.constant 0 : i32
    return %arg0, %c0_i32 : i32, i32
  }
}

</mosaic_0001>

<llo_original>
// kernel: tpu_custom_call.1
$region0: #{tpu_custom_call.1}
  #allocation0 [shape = 'u32[]', space=smem, size = 0x4, offset = 0x4, fixed_abs, tag = 'smem constant byte address 0x4 - core index']
  #allocation1 [shape = 'u32[144,128]{1,0:T(1,128)}', space=vmem, size = 0x12000, scoped, tag = 'internal scratch']
  %s0 = inlined_call_operand.hbm [shape: f32[8,64], index: 0, kind: input, shape index: {}]
  %s1 = inlined_call_operand.hbm [shape: bf16[320,128], index: 1, kind: input, shape index: {}]
  %s2 = inlined_call_operand.hbm [shape: f32[8,128], index: 2, kind: input, shape index: {}]
  %s3 = inlined_call_operand.vmem [shape: f32[8,2], index: 3, kind: output, shape index: {}]
  %s4 = sld [smem:[#allocation0]]
  $region68: #{tpu_custom_call.1} parent=0
    _
  %s6 = ssub.s32 1, %s4
  %s7 = scalar_select 0, %s6, %s4
  $region1: #{tpu_custom_call.1} parent=0
    #allocation2 [shape = 'u8[8192]{0}', space=vmem, size = 0x2000, scoped, tag = 'input window, operand 0, single buffered']
    #allocation3 [shape = 's32[1]{0}', space=sflag, size = 0x4, scoped, tag = 'scoped memory for tpu_custom_call.1']
    #allocation4 [shape = 'u8[81920]{0}', space=vmem, size = 0x14000, scoped, tag = 'input window, operand 1, single buffered']
    #allocation5 [shape = 's32[1]{0}', space=sflag, size = 0x4, scoped, tag = 'scoped memory for tpu_custom_call.1']
    #allocation6 [shape = 'u8[4096]{0}', space=vmem, size = 0x1000, scoped, tag = 'input window, operand 2, single buffered']
    #allocation7 [shape = 'u8[8192]{0}', space=vmem, size = 0x2000, scoped, tag = 'output window, operand 0, single buffered']
    %8 = vsyncpa [#allocation3], 0
    %9 = vsyncpa [#allocation5], 0
    // Predicated region
    $region2: #{tpu_custom_call.1} parent=1 // pred_check
      _
    $region3: #{tpu_custom_call.1} parent=1 // pred_check_branch
      %11 = sbr.rel (0) target = $region5
    $region4: #{tpu_custom_call.1} parent=1 // pred_region
      %s13 = ssub.s32 256, 128
      %14 = vsyncadd [#allocation3], %s13
      %s15 = sshll.u32 [#allocation2], 4
      %s16 = int_to_ptr.vmem [resolvable:$true] %s15
      %21 = dma.hbm_to_vmem [thread:$0]  %s0, 128, %s16, [#allocation3], 128, 128, 8
    $region5: #{tpu_custom_call.1} parent=1 // pred_fallthru
      _
    // Predicated region
    $region6: #{tpu_custom_call.1} parent=1 // pred_check
      _
    $region7: #{tpu_custom_call.1} parent=1 // pred_check_branch
      %23 = sbr.rel (0) target = $region9
    $region8: #{tpu_custom_call.1} parent=1 // pred_region
      %s25 = ssub.s32 2560, 2560
      %26 = vsyncadd [#allocation5], %s25
      %s27 = sshll.u32 [#allocation4], 4
      %s28 = int_to_ptr.vmem [resolvable:$true] %s27
      %33 = dma.hbm_to_vmem [thread:$0]  %s1, 2560, %s28, [#allocation5], 64, 64, 4
    $region9: #{tpu_custom_call.1} parent=1 // pred_fallthru
      _
    // Predicated region
    $region10: #{tpu_custom_call.1} parent=1 // pred_check
      _
    $region11: #{tpu_custom_call.1} parent=1 // pred_check_branch
      %35 = sbr.rel (0) target = $region13
    $region12: #{tpu_custom_call.1} parent=1 // pred_region
      %s37 = ssub.s32 128, 128
      %38 = vsyncadd [#allocation5], %s37
      %s40 = sshll.u32 [#allocation6], 4
      %s41 = int_to_ptr.vmem [resolvable:$true] %s40
      %43 = dma.hbm_to_vmem [thread:$0]  %s2, 128, %s41, [#allocation5]
    $region13: #{tpu_custom_call.1} parent=1 // pred_fallthru
      _
    // Predicated region
    $region14: #{tpu_custom_call.1} parent=1 // pred_check
      _
    $region15: #{tpu_custom_call.1} parent=1 // pred_check_branch
      %45 = sbr.rel (0) target = $region17
    $region16: #{tpu_custom_call.1} parent=1 // pred_region
      %46 = dma.done [#allocation3], 256
    $region17: #{tpu_custom_call.1} parent=1 // pred_fallthru
      _
    // Predicated region
    $region18: #{tpu_custom_call.1} parent=1 // pred_check
      _
    $region19: #{tpu_custom_call.1} parent=1 // pred_check_branch
      %48 = sbr.rel (0) target = $region21
    $region20: #{tpu_custom_call.1} parent=1 // pred_region
      %49 = dma.done [#allocation5], 2560
    $region21: #{tpu_custom_call.1} parent=1 // pred_fallthru
      _
    // Predicated region
    $region22: #{tpu_custom_call.1} parent=1 // pred_check
      _
    $region23: #{tpu_custom_call.1} parent=1 // pred_check_branch
      %51 = sbr.rel (0) target = $region25
    $region24: #{tpu_custom_call.1} parent=1 // pred_region
      %52 = dma.done [#allocation5], 128
    $region25: #{tpu_custom_call.1} parent=1 // pred_fallthru
      _
    %v54 = vld [vmem:[#allocation2] sm:$0xff]
    %v55 = vld [vmem:[#allocation2 + $0x8] sm:$0xff]
    %v56 = vpack.c.bf16 %v55, %v54
    %v57 = vld [vmem:[#allocation6] sm:$0xff]
    %v58 = vld [vmem:[#allocation4] sm:$0xf]
    %v59 = vld [vmem:[#allocation4 + $0x4] sm:$0xf]
    %v60 = vld [vmem:[#allocation4 + $0x8] sm:$0xf]
    %v61 = vld [vmem:[#allocation4 + $0xc] sm:$0xf]
    %v62 = vld [vmem:[#allocation4 + $0x10] sm:$0xf]
    %v63 = vld [vmem:[#allocation4 + $0x14] sm:$0xf]
    %v64 = vld [vmem:[#allocation4 + $0x18] sm:$0xf]
    %v65 = vld [vmem:[#allocation4 + $0x1c] sm:$0xf]
    %v66 = vlaneseq
    %v67 = vshrl.u32 %v66, 7
    %v68 = vsub.s32 0, %v67
    %v69 = vrot.slane %v57, %v68
    %v78 = vunpack.c.l.b16 %v58
    %v79 = vunpack.c.l.b16 %v59
    %v80 = vunpack.c.l.b16 %v60
    %v81 = vunpack.c.l.b16 %v61
    %v82 = vunpack.c.l.b16 %v62
    %v83 = vunpack.c.l.b16 %v63
    %v84 = vunpack.c.l.b16 %v64
    %v85 = vunpack.c.l.b16 %v65
    %v86 = vpack.c.b16 %v79, %v78
    %v87 = vpack.c.b16 %v81, %v80
    %v88 = vpack.c.b16 %v83, %v82
    %v89 = vpack.c.b16 %v85, %v84
    %vm94 = vcmask 523264
    %v96 = vsel %vm94, %v56, 0
    %98 = vmatprep.subr.bf16.mxu0 0
    %99 = vmatpush1.bf16.msra.mxu0 %v86
    %100 = vmatprep.subr.bf16.mxu0 0
    %101 = vmatpush1.bf16.msra.mxu0 %v87
    %102 = vmatprep.subr.bf16.mxu0 0
    %103 = vmatpush1.bf16.msra.mxu0 %v88
    %104 = vmatprep.subr.bf16.mxu0 0
    %105 = vmatpush1.bf16.msra.mxu0 %v89
    %106 = vmatprep.subr.bf16.mxu0 0
    %107 = vmatpush1.bf16.msra.mxu0 0
    %108 = vmatprep.subr.bf16.mxu0 0
    %109 = vmatpush1.bf16.msra.mxu0 0
    %110 = vmatprep.subr.bf16.mxu0 0
    %111 = vmatpush1.bf16.msra.mxu0 0
    %112 = vmatprep.subr.bf16.mxu0 0
    %113 = vmatpush1.bf16.msra.mxu0 0
    %114 = vmatprep.subr.bf16.mxu0 0
    %115 = vmatpush1.bf16.msra.mxu0 0
    %116 = vmatprep.subr.bf16.mxu0 0
    %117 = vmatpush1.bf16.msra.mxu0 0
    %118 = vmatprep.subr.bf16.mxu0 0
    %119 = vmatpush1.bf16.msra.mxu0 0
    %120 = vmatprep.subr.bf16.mxu0 0
    %121 = vmatpush1.bf16.msra.mxu0 0
    %122 = vmatprep.subr.bf16.mxu0 0
    %123 = vmatpush1.bf16.msra.mxu0 0
    %124 = vmatprep.subr.bf16.mxu0 0
    %125 = vmatpush1.bf16.msra.mxu0 0
    %126 = vmatprep.subr.bf16.mxu0 0
    %127 = vmatpush1.bf16.msra.mxu0 0
    %128 = vmatprep.subr.bf16.mxu0 0
    %129 = vmatpush1.bf16.msra.mxu0 0
    %130 = vmatprep.mubr.bf16.mxu0 0
    %131 = vmatmul.mubr.bf16.gmra.mrb[0].mxu0 %v96
    %v132 = vpop.f32.mrb[0].mxu0
    %v133 = vadd.f32 %v69, %v132
    %v134 = vpop.f32.mrb[0].mxu0
    %v135 = vpop.f32.mrb[0].mxu0
    %v136 = vadd.f32 %v69, %v135
    %v137 = vpop.f32.mrb[0].mxu0
    %138 = vdwg.mxu0
    %v139 = vtanh.pop %v133
    %v140 = vtanh.pop %v136
    %v141 = vpack.c.bf16 %v140, %v139
    %v142 = vld [vmem:[#allocation4 + $0x20] sm:$0xf]
    %v143 = vld [vmem:[#allocation4 + $0x24] sm:$0xf]
    %v144 = vld [vmem:[#allocation4 + $0x28] sm:$0xf]
    %v145 = vld [vmem:[#allocation4 + $0x2c] sm:$0xf]
    %v146 = vld [vmem:[#allocation4 + $0x30] sm:$0xf]
    %v147 = vld [vmem:[#allocation4 + $0x34] sm:$0xf]
    %v148 = vld [vmem:[#allocation4 + $0x38] sm:$0xf]
    %v149 = vld [vmem:[#allocation4 + $0x3c] sm:$0xf]
    %v150 = vld [vmem:[#allocation4 + $0x40] sm:$0xf]
    %v151 = vld [vmem:[#allocation4 + $0x44] sm:$0xf]
    %v152 = vld [vmem:[#allocation4 + $0x48] sm:$0xf]
    %v153 = vld [vmem:[#allocation4 + $0x4c] sm:$0xf]
    %v154 = vld [vmem:[#allocation4 + $0x50] sm:$0xf]
    %v155 = vld [vmem:[#allocation4 + $0x54] sm:$0xf]
    %v156 = vld [vmem:[#allocation4 + $0x58] sm:$0xf]
    %v157 = vld [vmem:[#allocation4 + $0x5c] sm:$0xf]
    %v158 = vlaneseq
    %v159 = vshrl.u32 %v158, 7
    %v160 = vsub.s32 1, %v159
    %v161 = vrot.slane %v57, %v160
    %v178 = vunpack.c.l.b16 %v142
    %v179 = vunpack.c.l.b16 %v143
    %v180 = vunpack.c.l.b16 %v144
    %v181 = vunpack.c.l.b16 %v145
    %v182 = vunpack.c.l.b16 %v146
    %v183 = vunpack.c.l.b16 %v147
    %v184 = vunpack.c.l.b16 %v148
    %v185 = vunpack.c.l.b16 %v149
    %v186 = vunpack.c.l.b16 %v150
    %v187 = vunpack.c.l.b16 %v151
    %v188 = vunpack.c.l.b16 %v152
    %v189 = vunpack.c.l.b16 %v153
    %v190 = vunpack.c.l.b16 %v154
    %v191 = vunpack.c.l.b16 %v155
    %v192 = vunpack.c.l.b16 %v156
    %v193 = vunpack.c.l.b16 %v157
    %v194 = vpack.c.b16 %v179, %v178
    %v195 = vpack.c.b16 %v181, %v180
    %v196 = vpack.c.b16 %v183, %v182
    %v197 = vpack.c.b16 %v185, %v184
    %v198 = vpack.c.b16 %v187, %v186
    %v199 = vpack.c.b16 %v189, %v188
    %v200 = vpack.c.b16 %v191, %v190
    %v201 = vpack.c.b16 %v193, %v192
    %210 = vmatprep.subr.bf16.mxu0 0
    %211 = vmatpush1.bf16.msra.mxu0 %v194
    %212 = vmatprep.subr.bf16.mxu0 0
    %213 = vmatpush1.bf16.msra.mxu0 %v195
    %214 = vmatprep.subr.bf16.mxu0 0
    %215 = vmatpush1.bf16.msra.mxu0 %v196
    %216 = vmatprep.subr.bf16.mxu0 0
    %217 = vmatpush1.bf16.msra.mxu0 %v197
    %218 = vmatprep.subr.bf16.mxu0 0
    %219 = vmatpush1.bf16.msra.mxu0 %v198
    %220 = vmatprep.subr.bf16.mxu0 0
    %221 = vmatpush1.bf16.msra.mxu0 %v199
    %222 = vmatprep.subr.bf16.mxu0 0
    %223 = vmatpush1.bf16.msra.mxu0 %v200
    %224 = vmatprep.subr.bf16.mxu0 0
    %225 = vmatpush1.bf16.msra.mxu0 %v201
    %226 = vmatprep.subr.bf16.mxu0 0
    %227 = vmatpush1.bf16.msra.mxu0 0
    %228 = vmatprep.subr.bf16.mxu0 0
    %229 = vmatpush1.bf16.msra.mxu0 0
    %230 = vmatprep.subr.bf16.mxu0 0
    %231 = vmatpush1.bf16.msra.mxu0 0
    %232 = vmatprep.subr.bf16.mxu0 0
    %233 = vmatpush1.bf16.msra.mxu0 0
    %234 = vmatprep.subr.bf16.mxu0 0
    %235 = vmatpush1.bf16.msra.mxu0 0
    %236 = vmatprep.subr.bf16.mxu0 0
    %237 = vmatpush1.bf16.msra.mxu0 0
    %238 = vmatprep.subr.bf16.mxu0 0
    %239 = vmatpush1.bf16.msra.mxu0 0
    %240 = vmatprep.subr.bf16.mxu0 0
    %241 = vmatpush1.bf16.msra.mxu0 0
    %242 = vmatprep.mubr.bf16.mxu0 0
    %243 = vmatmul.mubr.bf16.gmra.mrb[0].mxu0 %v141
    %v244 = vpop.f32.mrb[0].mxu0
    %v245 = vadd.f32 %v161, %v244
    %v246 = vpop.f32.mrb[0].mxu0
    %v247 = vpop.f32.mrb[0].mxu0
    %v248 = vadd.f32 %v161, %v247
    %v249 = vpop.f32.mrb[0].mxu0
    %250 = vdwg.mxu0
    %v251 = vtanh.pop %v245
    %v252 = vtanh.pop %v248
    %v253 = vpack.c.bf16 %v252, %v251
    %v254 = vld [vmem:[#allocation4 + $0x60] sm:$0xf]
    %v255 = vld [vmem:[#allocation4 + $0x64] sm:$0xf]
    %v256 = vld [vmem:[#allocation4 + $0x68] sm:$0xf]
    %v257 = vld [vmem:[#allocation4 + $0x6c] sm:$0xf]
    %v258 = vld [vmem:[#allocation4 + $0x70] sm:$0xf]
    %v259 = vld [vmem:[#allocation4 + $0x74] sm:$0xf]
    %v260 = vld [vmem:[#allocation4 + $0x78] sm:$0xf]
    %v261 = vld [vmem:[#allocation4 + $0x7c] sm:$0xf]
    %v262 = vld [vmem:[#allocation4 + $0x80] sm:$0xf]
    %v263 = vld [vmem:[#allocation4 + $0x84] sm:$0xf]
    %v264 = vld [vmem:[#allocation4 + $0x88] sm:$0xf]
    %v265 = vld [vmem:[#allocation4 + $0x8c] sm:$0xf]
    %v266 = vld [vmem:[#allocation4 + $0x90] sm:$0xf]
    %v267 = vld [vmem:[#allocation4 + $0x94] sm:$0xf]
    %v268 = vld [vmem:[#allocation4 + $0x98] sm:$0xf]
    %v269 = vld [vmem:[#allocation4 + $0x9c] sm:$0xf]
    %v270 = vlaneseq
    %v271 = vshrl.u32 %v270, 7
    %v272 = vsub.s32 2, %v271
    %v273 = vrot.slane %v57, %v272
    %v290 = vunpack.c.l.b16 %v254
    %v291 = vunpack.c.l.b16 %v255
    %v292 = vunpack.c.l.b16 %v256
    %v293 = vunpack.c.l.b16 %v257
    %v294 = vunpack.c.l.b16 %v258
    %v295 = vunpack.c.l.b16 %v259
    %v296 = vunpack.c.l.b16 %v260
    %v297 = vunpack.c.l.b16 %v261
    %v298 = vunpack.c.l.b16 %v262
    %v299 = vunpack.c.l.b16 %v263
    %v300 = vunpack.c.l.b16 %v264
    %v301 = vunpack.c.l.b16 %v265
    %v302 = vunpack.c.l.b16 %v266
    %v303 = vunpack.c.l.b16 %v267
    %v304 = vunpack.c.l.b16 %v268
    %v305 = vunpack.c.l.b16 %v269
    %v306 = vpack.c.b16 %v291, %v290
    %v307 = vpack.c.b16 %v293, %v292
    %v308 = vpack.c.b16 %v295, %v294
    %v309 = vpack.c.b16 %v297, %v296
    %v310 = vpack.c.b16 %v299, %v298
    %v311 = vpack.c.b16 %v301, %v300
    %v312 = vpack.c.b16 %v303, %v302
    %v313 = vpack.c.b16 %v305, %v304
    %322 = vmatprep.subr.bf16.mxu0 0
    %323 = vmatpush1.bf16.msra.mxu0 %v306
    %324 = vmatprep.subr.bf16.mxu0 0
    %325 = vmatpush1.bf16.msra.mxu0 %v307
    %326 = vmatprep.subr.bf16.mxu0 0
    %327 = vmatpush1.bf16.msra.mxu0 %v308
    %328 = vmatprep.subr.bf16.mxu0 0
    %329 = vmatpush1.bf16.msra.mxu0 %v309
    %330 = vmatprep.subr.bf16.mxu0 0
    %331 = vmatpush1.bf16.msra.mxu0 %v310
    %332 = vmatprep.subr.bf16.mxu0 0
    %333 = vmatpush1.bf16.msra.mxu0 %v311
    %334 = vmatprep.subr.bf16.mxu0 0
    %335 = vmatpush1.bf16.msra.mxu0 %v312
    %336 = vmatprep.subr.bf16.mxu0 0
    %337 = vmatpush1.bf16.msra.mxu0 %v313
    %338 = vmatprep.subr.bf16.mxu0 0
    %339 = vmatpush1.bf16.msra.mxu0 0
    %340 = vmatprep.subr.bf16.mxu0 0
    %341 = vmatpush1.bf16.msra.mxu0 0
    %342 = vmatprep.subr.bf16.mxu0 0
    %343 = vmatpush1.bf16.msra.mxu0 0
    %344 = vmatprep.subr.bf16.mxu0 0
    %345 = vmatpush1.bf16.msra.mxu0 0
    %346 = vmatprep.subr.bf16.mxu0 0
    %347 = vmatpush1.bf16.msra.mxu0 0
    %348 = vmatprep.subr.bf16.mxu0 0
    %349 = vmatpush1.bf16.msra.mxu0 0
    %350 = vmatprep.subr.bf16.mxu0 0
    %351 = vmatpush1.bf16.msra.mxu0 0
    %352 = vmatprep.subr.bf16.mxu0 0
    %353 = vmatpush1.bf16.msra.mxu0 0
    %354 = vmatprep.mubr.bf16.mxu0 0
    %355 = vmatmul.mubr.bf16.gmra.mrb[0].mxu0 %v253
    %v356 = vpop.f32.mrb[0].mxu0
    %v357 = vadd.f32 %v273, %v356
    %v358 = vpop.f32.mrb[0].mxu0
    %v359 = vpop.f32.mrb[0].mxu0
    %v360 = vadd.f32 %v273, %v359
    %v361 = vpop.f32.mrb[0].mxu0
    %362 = vdwg.mxu0
    %vm363 = vcmask 15360
    %364 = vst.msk [vmem:[#allocation7] sm:$0xff] %vm363, %v357
    %365 = vst.msk [vmem:[#allocation7 + $0x8] sm:$0xff] %vm363, %v360
    // Predicated region
    $region26: #{tpu_custom_call.1} parent=1 // pred_check
      _
    $region27: #{tpu_custom_call.1} parent=1 // pred_check_branch
      %367 = sbr.rel (0) target = $region29
    $region28: #{tpu_custom_call.1} parent=1 // pred_region
      // Predicated region
      $region30: #{tpu_custom_call.1} parent=28 // pred_check
        _
      $region31: #{tpu_custom_call.1} parent=28 // pred_check_branch
        %369 = sbr.rel (0) target = $region33
      $region32: #{tpu_custom_call.1} parent=28 // pred_region
        // Predicated region
        $region34: #{tpu_custom_call.1} parent=32 // pred_check
          _
        $region35: #{tpu_custom_call.1} parent=32 // pred_check_branch
          %371 = sbr.rel (0) target = $region37
        $region36: #{tpu_custom_call.1} parent=32 // pred_region
          // Predicated region
          $region49: #{tpu_custom_call.1} parent=36 // pred_check
            _
          $region50: #{tpu_custom_call.1} parent=36 // pred_check_branch
            %386 = sbr.rel (0) target = $region52
          $region51: #{tpu_custom_call.1} parent=36 // pred_region
            loop: start=0, step=1, limit=1
            $region53: #{tpu_custom_call.1} parent=51 // loop_pre_header
              _
            $region54: #{tpu_custom_call.1} parent=51 // loop_header
              %s388 = sphi 0, %s392
              %p389 = scmp.ge.s32.totalorder %s388, 1
              %s393 = sphi [#allocation7], [#allocation7]
              %s394 = sphi %s3, %s3
            $region55: #{tpu_custom_call.1} parent=51 // loop_header_branch
              %391 = sbr.rel (%p389) target = $region59
            $region56: #{tpu_custom_call.1} parent=51 // loop_body
              %v395 = vld [vmem:[%s393] sm:$0xff]
              %396 = vst [vmem:[%s394] sm:$0xff] %v395
            $region57: #{tpu_custom_call.1} parent=51 // loop_footer
              %s392 = sadd.s32 1, %s388
            $region58: #{tpu_custom_call.1} parent=51 // loop_footer_branch
              %387 = sbr.rel target = $region54
            $region59: #{tpu_custom_call.1} parent=51 // loop_exit
              _
          $region52: #{tpu_custom_call.1} parent=36 // pred_fallthru
            _
          // Predicated region
          $region60: #{tpu_custom_call.1} parent=36 // pred_check
            _
          $region61: #{tpu_custom_call.1} parent=36 // pred_check_branch
            %398 = sbr.rel target = $region63
          $region62: #{tpu_custom_call.1} parent=36 // pred_region
            _
          $region63: #{tpu_custom_call.1} parent=36 // pred_fallthru
            _
        $region37: #{tpu_custom_call.1} parent=32 // pred_fallthru
          _
        // Predicated region
        $region38: #{tpu_custom_call.1} parent=32 // pred_check
          _
        $region39: #{tpu_custom_call.1} parent=32 // pred_check_branch
          %373 = sbr.rel target = $region41
        $region40: #{tpu_custom_call.1} parent=32 // pred_region
          loop: start=0, step=1, limit=1
          $region42: #{tpu_custom_call.1} parent=40 // loop_pre_header
            _
          $region43: #{tpu_custom_call.1} parent=40 // loop_header
            %s376 = sphi 0, %s380
            %p377 = scmp.ge.s32.totalorder %s376, 1
            %s381 = sphi [#allocation7], [#allocation7]
            %s382 = sphi %s3, %s3
          $region44: #{tpu_custom_call.1} parent=40 // loop_header_branch
            %379 = sbr.rel (%p377) target = $region48
          $region45: #{tpu_custom_call.1} parent=40 // loop_body
            %v383 = vld [vmem:[%s381] sm:$0xff]
            %384 = vst [vmem:[%s382] sm:$0xff] %v383
          $region46: #{tpu_custom_call.1} parent=40 // loop_footer
            %s380 = sadd.s32 1, %s376
          $region47: #{tpu_custom_call.1} parent=40 // loop_footer_branch
            %375 = sbr.rel target = $region43
          $region48: #{tpu_custom_call.1} parent=40 // loop_exit
            _
        $region41: #{tpu_custom_call.1} parent=32 // pred_fallthru
          _
      $region33: #{tpu_custom_call.1} parent=28 // pred_fallthru
        _
      %399 = vnop
    $region29: #{tpu_custom_call.1} parent=1 // pred_fallthru
      _
    // Predicated region
    $region64: #{tpu_custom_call.1} parent=1 // pred_check
      _
    $region65: #{tpu_custom_call.1} parent=1 // pred_check_branch
      %401 = sbr.rel (0) target = $region67
    $region66: #{tpu_custom_call.1} parent=1 // pred_region
      _
    $region67: #{tpu_custom_call.1} parent=1 // pred_fallthru
      _
    %402 = vsyncpa [#allocation3], 1
    %403 = vsyncpa [#allocation5], 1

</llo_original>
